<compile_context>
chip_gen: v7x
topology: tpu7x:2x2x1
jax: 0.10.0
libtpu: 0.0.40
codegen_flags: <defaults>
</compile_context>

<pallas_src>
import jax
import jax.numpy as jnp
from jax.experimental import pallas as pl
from jax.experimental.pallas import tpu as pltpu

NUM_SRC_CLASSES = 10                 # source labels emitted by the (synthetic) point decoder
NUM_CLASSES = 8                      # evaluation classes after remap
IGNORE = 255
HIDDEN = 32
OUT_RAW = NUM_SRC_CLASSES + 2        # 10 class logits + sigma logit + invalid logit
HEAD_PAD = 16                        # pad head rows to two full sublane tiles (aligned slices)
SIGMA_ROW = NUM_SRC_CLASSES          # row 10: sigma logit
INVALID_ROW = NUM_SRC_CLASSES + 1    # row 11: invalid logit
INVALID_LOGIT_THRESHOLD = 3.0
# TODO(synk): the invalid head thresholds a raw logit in this synthetic stand-in; the real
# renderer.net returns an explicit invalid mask (invalid -> sigma=1 -> occupied, class 255).

X_RANGE = (-28.57, 28.57)
Y_RANGE = (0.5, -1.5)
Z_RANGE = (52.38, 0.0)

# class remap {source label -> eval class}; everything else (incl. -1/invalid) -> 255
REMAP = ((0, 0), (1, 1), (2, 2), (5, 3), (6, 4), (9, 5), (7, 6), (8, 7))

CAM_INCL_ADJUST = jnp.array(
    [[1.0, 0.0, 0.0, 0.0],
     [0.0, 0.9961947, 0.0871557, 0.0],
     [0.0, -0.0871557, 0.9961947, 0.0],
     [0.0, 0.0, 0.0, 1.0]], dtype=jnp.float32)

VMEM_LIMIT_BYTES = 32 * 1024 * 1024  # explicit scoped-VMEM limit; safe on v5e/v6e/v7x


# --------------------------------------------------------------------------------------
# Tile pickers: lane-dense output blocks, sized against an explicit VMEM scratch budget
# --------------------------------------------------------------------------------------
def _bev_tile_bytes(tz, x_res):
    """Rough peak in-kernel scratch of one z-tile of the fused BEV kernel."""
    p = tz * x_res
    per_point = (2 * HIDDEN * 4      # h_base + h            (f32)
                 + 2 * HEAD_PAD * 4  # out + best_out carry  (f32)
                 + 6 * 8 * 4         # ~6 (1,P) temporaries, sublane-padded worst case
                 + 2 * 4)            # double-buffered int32 output block
    return p * per_point


def _pick_z_tile(z_res, x_res, budget_bytes=20 * 1024 * 1024):
    """Largest z-tile whose output block stays lane-dense and whose scratch fits the budget."""
    def lane_dense(tz):
        return (tz * x_res) % 128 == 0 or tz == z_res

    best = None
    for tz in range(1, z_res + 1):
        if z_res % tz == 0 and lane_dense(tz) and _bev_tile_bytes(tz, x_res) <= budget_bytes:
            best = tz
    if best is not None:
        return best
    for tz in range(1, z_res + 1):   # nothing fits the budget: smallest lane-dense tile
        if z_res % tz == 0 and lane_dense(tz):
            return tz
    return z_res


def _pick_p_tile(p, max_elems=1 << 18):
    """Confusion-matrix tile: whole array if it fits, else the largest 128-multiple divisor."""
    if p <= max_elems:
        return p
    best = None
    for tp in range(128, max_elems + 1, 128):
        if p % tp == 0:
            best = tp
    return best if best is not None else p


# --------------------------------------------------------------------------------------
# Kernel 1: fused point-query MLP + first-occupied-along-y BEV reduction (per z-tile)
# --------------------------------------------------------------------------------------
def _make_fused_bev_kernel(y_res, z_res, x_res, tz, h_dtype):
    P = tz * x_res
    x0 = float(X_RANGE[0])
    dx = (X_RANGE[1] - X_RANGE[0]) / (x_res - 1) if x_res > 1 else 0.0
    y0 = float(Y_RANGE[0])
    dy = (Y_RANGE[1] - Y_RANGE[0]) / (y_res - 1) if y_res > 1 else 0.0
    z0 = float(Z_RANGE[0])
    dz = (Z_RANGE[1] - Z_RANGE[0]) / (z_res - 1) if z_res > 1 else 0.0

    def kernel(w1x_ref, w1y_ref, w1z_ref, b1_ref, w2p_ref, b2p_ref, bev_ref):
        # ---- in-kernel query-point generation (get_pts2 without cam_incl_adjust) ----
        p_idx = jax.lax.broadcasted_iota(jnp.int32, (1, P), 1).astype(jnp.float32)
        # float floor-div is exact here (P < 2**24); avoids vector integer div/mod.
        zi = jnp.floor(p_idx / float(x_res))                      # local z index (1, P)
        xi = p_idx - zi * float(x_res)                            # x index       (1, P)
        xv = x0 + xi * dx                                         # (1, P)
        z_base = (pl.program_id(0) * tz).astype(jnp.float32)
        zv = z0 + (z_base + zi) * dz                              # (1, P)

        w1x = w1x_ref[...]                                        # (HIDDEN, 1)
        w1y = w1y_ref[...]                                        # (HIDDEN, 1)
        w1z = w1z_ref[...]                                        # (HIDDEN, 1)
        b1 = b1_ref[...]                                          # (HIDDEN, 1)
        w2p = w2p_ref[...].astype(h_dtype)                        # (HEAD_PAD, HIDDEN)
        b2p = b2p_ref[...]                                        # (HEAD_PAD, 1) f32

        # layer 1 as hoisted VPU FMAs: only x/y/z input features are non-zero, so
        # h = relu(h_base + W1y*y) with h_base = W1x*x + W1z*z + b1 (no (8,P) point slab,
        # no K=8 MXU push). h_base is loop-invariant over y.
        h_base = (w1x * xv + w1z * zv + b1).astype(h_dtype)       # (HIDDEN, P)

        def body(y, carry):
            found, best_inv, best_out = carry
            yv = y0 + y.astype(jnp.float32) * dy                  # scalar
            h = jnp.maximum(h_base + (w1y * yv).astype(h_dtype), 0.0)          # (HIDDEN, P)
            out = jnp.dot(w2p, h, preferred_element_type=jnp.float32) + b2p    # (HEAD_PAD, P)

            sig_logit = out[SIGMA_ROW:SIGMA_ROW + 1, :]           # (1, P)
            inv_logit = out[INVALID_ROW:INVALID_ROW + 1, :]       # (1, P)
            inv = inv_logit > INVALID_LOGIT_THRESHOLD             # invalid mask
            # sigmoid(s) > 0.5  <=>  s > 0 ; invalid forces sigma = 1 (occupied)
            occ = jnp.logical_or(inv, sig_logit > 0.0)
            # first occupied y wins; y == 0 provides the default when nothing is occupied
            take = jnp.logical_or(jnp.logical_and(occ, found == 0), y == 0)
            best_out = jnp.where(take, out, best_out)
            best_inv = jnp.where(take, inv.astype(jnp.int32), best_inv)
            found = jnp.where(occ, 1, found)
            return found, best_inv, best_out

        init = (jnp.zeros((1, P), jnp.int32),
                jnp.zeros((1, P), jnp.int32),
                jnp.zeros((HEAD_PAD, P), jnp.float32))
        _, best_inv, best_out = jax.lax.fori_loop(0, y_res, body, init)

        # argmax over source-class logits — once per z-tile, not per y-slice
        rows = jax.lax.broadcasted_iota(jnp.int32, (HEAD_PAD, P), 0)
        logits = jnp.where(rows < NUM_SRC_CLASSES, best_out, -jnp.inf)
        m = jnp.max(logits, axis=0, keepdims=True)
        cls = jnp.min(jnp.where(logits == m, rows, HEAD_PAD), axis=0, keepdims=True)
        cls = jnp.where(best_inv != 0, -1, cls)                   # pred_class[invalid] = -1

        # class remap: {0:0, 1:1, 2:2, 5:3, 6:4, 9:5, 7:6, 8:7, -1/3/4/other: 255}
        remapped = jnp.full((1, P), IGNORE, jnp.int32)
        for src, dst in REMAP:
            remapped = jnp.where(cls == src, dst, remapped)
        bev_ref[...] = remapped

    return kernel


def bev_from_queries(params, *, y_res, z_res, x_res, tz=None, h_dtype=jnp.float32):
    """Fused synthetic point-decoder MLP + first-occupied-along-y BEV reduction.

    Returns the class-remapped BEV as a flat (1, z_res*x_res) int32 array (row-major z, x).
    Set h_dtype=jnp.bfloat16 on v6e/v7x to halve the hidden-activation VPU/VMEM cost
    (keep the default float32 on v5e, whose VPU has no native bf16).
    """
    w1, b1, w2, b2 = params
    w1 = jnp.asarray(w1, jnp.float32)                       # (3, HIDDEN): x/y/z rows
    w1x = w1[0].reshape(HIDDEN, 1)
    w1y = w1[1].reshape(HIDDEN, 1)
    w1z = w1[2].reshape(HIDDEN, 1)
    b1c = jnp.asarray(b1, jnp.float32).reshape(HIDDEN, 1)
    w2t = jnp.transpose(jnp.asarray(w2, jnp.float32))       # (OUT_RAW, HIDDEN)
    w2p = jnp.zeros((HEAD_PAD, HIDDEN), jnp.float32).at[:OUT_RAW].set(w2t)
    b2p = jnp.zeros((HEAD_PAD, 1), jnp.float32).at[:OUT_RAW].set(
        jnp.asarray(b2, jnp.float32).reshape(OUT_RAW, 1))

    if tz is None:
        tz = _pick_z_tile(z_res, x_res)
    assert z_res % tz == 0

    kernel = _make_fused_bev_kernel(y_res, z_res, x_res, tz, h_dtype)
    return pl.pallas_call(
        kernel,
        out_shape=jax.ShapeDtypeStruct((1, z_res * x_res), jnp.int32),
        grid=(z_res // tz,),
        in_specs=[
            pl.BlockSpec((HIDDEN, 1), lambda i: (0, 0)),
            pl.BlockSpec((HIDDEN, 1), lambda i: (0, 0)),
            pl.BlockSpec((HIDDEN, 1), lambda i: (0, 0)),
            pl.BlockSpec((HIDDEN, 1), lambda i: (0, 0)),
            pl.BlockSpec((HEAD_PAD, HIDDEN), lambda i: (0, 0)),
            pl.BlockSpec((HEAD_PAD, 1), lambda i: (0, 0)),
        ],
        out_specs=pl.BlockSpec((1, tz * x_res), lambda i: (0, i)),
        compiler_params=pltpu.CompilerParams(
            dimension_semantics=("parallel",),          # z-tiles split across TCs on v7x
            vmem_limit_bytes=VMEM_LIMIT_BYTES),
    )(w1x, w1y, w1z, b1c, w2p, b2p)


# --------------------------------------------------------------------------------------
# Kernel 2: confusion matrix — large pixel tiles, on-chip (8,8) accumulator
# --------------------------------------------------------------------------------------
def _confmat_kernel(pred_ref, gt_ref, conf_ref):
    @pl.when(pl.program_id(0) == 0)
    def _():
        conf_ref[...] = jnp.zeros_like(conf_ref)

    pred = pred_ref[...]                                                    # (1, TP) int32
    gt = gt_ref[...]                                                        # (1, TP) int32
    classes_col = jax.lax.broadcasted_iota(jnp.int32, (NUM_CLASSES, 1), 0)  # (8, 1)
    # gt_bev[new_pred_bev == 255] = 255  ==>  count only pixels valid in BOTH maps
    valid = jnp.logical_and(gt != IGNORE, pred != IGNORE)                   # (1, TP)
    pred_oh = (pred == classes_col).astype(jnp.float32)                     # (8, TP)
    gt_oh = jnp.logical_and(gt == classes_col, valid).astype(jnp.float32)   # (8, TP)
    # contract the lane (point) axis directly: no (TP, 8) transpose is materialized.
    # f32 accumulation is exact to 2**24 counts/cell — plenty for one frame.
    conf_ref[...] += jax.lax.dot_general(
        gt_oh, pred_oh, (((1,), (1,)), ((), ())),
        preferred_element_type=jnp.float32)


def confusion_matrix(pred_bev, gt_bev, tp=None):
    p = pred_bev.size
    pred = pred_bev.reshape(1, p).astype(jnp.int32)
    gt = gt_bev.reshape(1, p).astype(jnp.int32)
    if tp is None:
        tp = _pick_p_tile(p)
    assert p % tp == 0
    return pl.pallas_call(
        _confmat_kernel,
        out_shape=jax.ShapeDtypeStruct((NUM_CLASSES, NUM_CLASSES), jnp.float32),
        grid=(p // tp,),
        in_specs=[
            pl.BlockSpec((1, tp), lambda i: (0, i)),
            pl.BlockSpec((1, tp), lambda i: (0, i)),
        ],
        out_specs=pl.BlockSpec((NUM_CLASSES, NUM_CLASSES), lambda i: (0, 0)),
        compiler_params=pltpu.CompilerParams(
            dimension_semantics=("arbitrary",),
            vmem_limit_bytes=VMEM_LIMIT_BYTES),
    )(pred, gt)


# --------------------------------------------------------------------------------------
# Glue (plain JAX): pose normalization, rot90, mIoU
# --------------------------------------------------------------------------------------
def bts_forward(data, params, *, y_res, z_res, x_res, tz=None, tp=None,
                h_dtype=jnp.float32):
    images = jnp.stack(data['imgs'], axis=1)             # (n, v, c, h, w)
    poses = jnp.stack(data['poses'], axis=1)              # (n, v, 4, 4)
    projs = jnp.stack(data['projs'], axis=1)               # (n, v, 3, 3)
    gt_bev = jnp.stack(data['bev'], axis=1).squeeze()      # (X, Z)

    # pose normalization (same math as the reference; would feed the external encoder)
    world_transform = jnp.linalg.inv(poses[:, :1, :, :])
    world_transform = CAM_INCL_ADJUST[None, None] @ world_transform
    poses = world_transform @ poses
    images_alt = images * 0.5 + 0.5
    del projs, images_alt, poses
    # TODO(synk): renderer.net.encode(...) / volume_encode(...) is an external learned conv
    # encoder; renderer.net(q_pts) is replaced by a deterministic synthetic point-query MLP
    # evaluated inside the fused Pallas kernel (query points generated in-kernel, mirroring
    # get_pts2 without cam_incl_adjust, exactly as forward() does).

    pred_flat = bev_from_queries(params, y_res=y_res, z_res=z_res, x_res=x_res,
                                 tz=tz, h_dtype=h_dtype)
    pred_bev = pred_flat.reshape(z_res, x_res)            # (Z, X), already class-remapped
    pred_bev = jnp.rot90(pred_bev, k=-1)                  # (X, Z); remap commutes with rot90

    confmat = confusion_matrix(pred_bev, gt_bev, tp=tp)   # (8, 8)

    inter = jnp.diag(confmat)
    union = confmat.sum(axis=1) + confmat.sum(axis=0)[:NUM_CLASSES] - inter + 1e-8
    miou = inter / union
    miou = jnp.where(miou < 1e-5, jnp.nan, miou)

    out = dict(data)
    names = ['road', 'sidewalk', 'building', 'terrain', 'person', '2-wheeler', 'car', 'truck']
    for i, name in enumerate(names):
        out[name] = miou[i]
    return out, pred_bev, confmat


# --------------------------------------------------------------------------------------
if __name__ == "__main__":
    key = jax.random.PRNGKey(0)
    ks = jax.random.split(key, 8)

    # small shapes consistent with the module (real: y_res=20, z_res=704, x_res=768)
    Y_RES, Z_RES, X_RES = 8, 16, 16
    n, v, c, h, w = 1, 2, 3, 16, 16

    # deterministic synthetic "renderer.net" point-decoder parameters
    w1 = jax.random.normal(ks[0], (3, HIDDEN), jnp.float32) * 0.5
    b1 = jax.random.normal(ks[1], (1, HIDDEN), jnp.float32) * 0.1
    w2 = jax.random.normal(ks[2], (HIDDEN, OUT_RAW), jnp.float32) * 0.5
    b2 = jax.random.normal(ks[3], (1, OUT_RAW), jnp.float32) * 0.1
    params = (w1, b1, w2, b2)

    imgs = [jax.random.uniform(ks[4 + i], (n, c, h, w), jnp.float32) * 2.0 - 1.0
            for i in range(v)]
    poses = [jnp.broadcast_to(jnp.eye(4, dtype=jnp.float32), (n, 4, 4)) for _ in range(v)]
    projs = [jnp.broadcast_to(jnp.eye(3, dtype=jnp.float32), (n, 3, 3)) for _ in range(v)]
    gt_raw = jax.random.randint(ks[6], (n, X_RES, Z_RES), 0, 10)
    gt = jnp.where(gt_raw >= NUM_CLASSES, IGNORE, gt_raw).astype(jnp.int32)

    data = {'imgs': imgs, 'poses': poses, 'projs': projs, 'bev': [gt], 'index': 0}

    # tz=8 -> 2 z-tiles for the fused BEV kernel; confmat tile auto (whole array here)
    out, pred_bev, confmat = bts_forward(data, params, y_res=Y_RES, z_res=Z_RES, x_res=X_RES,
                                         tz=8)
    jax.block_until_ready((pred_bev, confmat))
    _ = [float(out[k]) for k in
         ['road', 'sidewalk', 'building', 'terrain', 'person', '2-wheeler', 'car', 'truck']]
    print("KERNEL_OK")
</pallas_src>

<mosaic_0001>
module attributes {stable_mosaic.version = 11 : i64} {
  func.func @kernel(%arg0: i32, %arg1: memref<32x1xf32, #tpu.memory_space<vmem>>, %arg2: memref<32x1xf32, #tpu.memory_space<vmem>>, %arg3: memref<32x1xf32, #tpu.memory_space<vmem>>, %arg4: memref<32x1xf32, #tpu.memory_space<vmem>>, %arg5: memref<16x32xf32, #tpu.memory_space<vmem>>, %arg6: memref<16x1xf32, #tpu.memory_space<vmem>>, %arg7: memref<1x128xi32, #tpu.memory_space<vmem>>) attributes {dimension_semantics = [#tpu.dimension_semantics<parallel>], iteration_bounds = array<i64: 2>, scalar_prefetch = 0 : i64, scratch_operands = 0 : i64, tpu.core_type = #tpu.core_type<tc>, window_params = [{pipeline_mode = #tpu.pipeline_mode<synchronous>, transform_indices = @transform_0, window_bounds = array<i64: 32, 1>}, {pipeline_mode = #tpu.pipeline_mode<synchronous>, transform_indices = @transform_1, window_bounds = array<i64: 32, 1>}, {pipeline_mode = #tpu.pipeline_mode<synchronous>, transform_indices = @transform_2, window_bounds = array<i64: 32, 1>}, {pipeline_mode = #tpu.pipeline_mode<synchronous>, transform_indices = @transform_3, window_bounds = array<i64: 32, 1>}, {pipeline_mode = #tpu.pipeline_mode<synchronous>, transform_indices = @transform_4, window_bounds = array<i64: 16, 32>}, {pipeline_mode = #tpu.pipeline_mode<synchronous>, transform_indices = @transform_5, window_bounds = array<i64: 16, 1>}, {transform_indices = @transform_6, window_bounds = array<i64: 1, 128>}]} {
    %0 = tpu.iota {dimensions = array<i32: 1>} : vector<1x128xi32>
    %1 = arith.sitofp %0 : vector<1x128xi32> to vector<1x128xf32>
    %cst = arith.constant 1.600000e+01 : f32
    %2 = vector.broadcast %cst : f32 to vector<1x128xf32>
    %3 = arith.divf %1, %2 : vector<1x128xf32>
    %4 = math.floor %3 : vector<1x128xf32>
    %cst_0 = arith.constant 1.600000e+01 : f32
    %5 = vector.broadcast %cst_0 : f32 to vector<1x128xf32>
    %6 = arith.mulf %4, %5 : vector<1x128xf32>
    %7 = arith.subf %1, %6 : vector<1x128xf32>
    %cst_1 = arith.constant 3.80933332 : f32
    %8 = vector.broadcast %cst_1 : f32 to vector<1x128xf32>
    %9 = arith.mulf %7, %8 : vector<1x128xf32>
    %cst_2 = arith.constant -2.857000e+01 : f32
    %10 = vector.broadcast %cst_2 : f32 to vector<1x128xf32>
    %11 = arith.addf %10, %9 : vector<1x128xf32>
    %c8_i32 = arith.constant 8 : i32
    %12 = arith.muli %arg0, %c8_i32 : i32
    %13 = arith.sitofp %12 : i32 to f32
    %14 = vector.broadcast %13 : f32 to vector<1x128xf32>
    %15 = arith.addf %14, %4 : vector<1x128xf32>
    %cst_3 = arith.constant -3.492000e+00 : f32
    %16 = vector.broadcast %cst_3 : f32 to vector<1x128xf32>
    %17 = arith.mulf %15, %16 : vector<1x128xf32>
    %cst_4 = arith.constant 5.238000e+01 : f32
    %18 = vector.broadcast %cst_4 : f32 to vector<1x128xf32>
    %19 = arith.addf %18, %17 : vector<1x128xf32>
    %c0 = arith.constant 0 : index
    %c0_5 = arith.constant 0 : index
    %20 = vector.load %arg1[%c0, %c0_5] : memref<32x1xf32, #tpu.memory_space<vmem>>, vector<32x1xf32>
    %c0_6 = arith.constant 0 : index
    %c0_7 = arith.constant 0 : index
    %21 = vector.load %arg2[%c0_6, %c0_7] : memref<32x1xf32, #tpu.memory_space<vmem>>, vector<32x1xf32>
    %c0_8 = arith.constant 0 : index
    %c0_9 = arith.constant 0 : index
    %22 = vector.load %arg3[%c0_8, %c0_9] : memref<32x1xf32, #tpu.memory_space<vmem>>, vector<32x1xf32>
    %c0_10 = arith.constant 0 : index
    %c0_11 = arith.constant 0 : index
    %23 = vector.load %arg4[%c0_10, %c0_11] : memref<32x1xf32, #tpu.memory_space<vmem>>, vector<32x1xf32>
    %c0_12 = arith.constant 0 : index
    %c0_13 = arith.constant 0 : index
    %24 = vector.load %arg5[%c0_12, %c0_13] : memref<16x32xf32, #tpu.memory_space<vmem>>, vector<16x32xf32>
    %c0_14 = arith.constant 0 : index
    %c0_15 = arith.constant 0 : index
    %25 = vector.load %arg6[%c0_14, %c0_15] : memref<16x1xf32, #tpu.memory_space<vmem>>, vector<16x1xf32>
    %26 = vector.broadcast %20 : vector<32x1xf32> to vector<32x128xf32>
    %27 = vector.broadcast %11 : vector<1x128xf32> to vector<32x128xf32>
    %28 = arith.mulf %26, %27 : vector<32x128xf32>
    %29 = vector.broadcast %22 : vector<32x1xf32> to vector<32x128xf32>
    %30 = vector.broadcast %19 : vector<1x128xf32> to vector<32x128xf32>
    %31 = arith.mulf %29, %30 : vector<32x128xf32>
    %32 = arith.addf %28, %31 : vector<32x128xf32>
    %33 = vector.broadcast %23 : vector<32x1xf32> to vector<32x128xf32>
    %34 = arith.addf %32, %33 : vector<32x128xf32>
    %c0_i32 = arith.constant 0 : i32
    %35 = vector.broadcast %c0_i32 : i32 to vector<1x128xi32>
    %c0_i32_16 = arith.constant 0 : i32
    %36 = vector.broadcast %c0_i32_16 : i32 to vector<1x128xi32>
    %cst_17 = arith.constant 0.000000e+00 : f32
    %37 = vector.broadcast %cst_17 : f32 to vector<16x128xf32>
    %c0_i32_18 = arith.constant 0 : i32
    %c8_i32_19 = arith.constant 8 : i32
    %38 = arith.addi %c0_i32_18, %c8_i32_19 : i32
    %c1_i32 = arith.constant 1 : i32
    %39:3 = scf.for %arg8 = %c0_i32_18 to %38 step %c1_i32 iter_args(%arg9 = %35, %arg10 = %36, %arg11 = %37) -> (vector<1x128xi32>, vector<1x128xi32>, vector<16x128xf32>)  : i32 {
      %91 = arith.sitofp %arg8 : i32 to f32
      %cst_36 = arith.constant -0.285714298 : f32
      %92 = arith.mulf %91, %cst_36 : f32
      %cst_37 = arith.constant 5.000000e-01 : f32
      %93 = arith.addf %cst_37, %92 : f32
      %94 = vector.broadcast %93 : f32 to vector<32x1xf32>
      %95 = arith.mulf %21, %94 : vector<32x1xf32>
      %96 = vector.broadcast %95 : vector<32x1xf32> to vector<32x128xf32>
      %97 = arith.addf %34, %96 : vector<32x128xf32>
      %cst_38 = arith.constant 0.000000e+00 : f32
      %98 = vector.broadcast %cst_38 : f32 to vector<32x128xf32>
      %99 = arith.maximumf %97, %98 : vector<32x128xf32>
      %cst_39 = arith.constant dense<0.000000e+00> : vector<16x128xf32>
      %100 = tpu.matmul %24, %99, %cst_39 {dimension_numbers = #tpu.dot_dimension_numbers<[1], [0], [0], [1], [0, 0, 1, 1], [], []>} : vector<16x32xf32>, vector<32x128xf32>, vector<16x128xf32> -> vector<16x128xf32>
      %101 = vector.broadcast %25 : vector<16x1xf32> to vector<16x128xf32>
      %102 = arith.addf %100, %101 : vector<16x128xf32>
      %103 = vector.extract_strided_slice %102 {offsets = [10, 0], sizes = [1, 128], strides = [1, 1]} : vector<16x128xf32> to vector<1x128xf32>
      %104 = vector.extract_strided_slice %102 {offsets = [11, 0], sizes = [1, 128], strides = [1, 1]} : vector<16x128xf32> to vector<1x128xf32>
      %cst_40 = arith.constant 3.000000e+00 : f32
      %105 = vector.broadcast %cst_40 : f32 to vector<1x128xf32>
      %106 = arith.cmpf ogt, %104, %105 : vector<1x128xf32>
      %cst_41 = arith.constant 0.000000e+00 : f32
      %107 = vector.broadcast %cst_41 : f32 to vector<1x128xf32>
      %108 = arith.cmpf ogt, %103, %107 : vector<1x128xf32>
      %109 = arith.ori %106, %108 : vector<1x128xi1>
      %c0_i32_42 = arith.constant 0 : i32
      %110 = vector.broadcast %c0_i32_42 : i32 to vector<1x128xi32>
      %111 = arith.cmpi eq, %arg9, %110 : vector<1x128xi32>
      %112 = arith.andi %109, %111 : vector<1x128xi1>
      %c0_i32_43 = arith.constant 0 : i32
      %113 = arith.cmpi eq, %arg8, %c0_i32_43 : i32
      %114 = vector.broadcast %113 : i1 to vector<1x128xi1>
      %115 = arith.ori %112, %114 : vector<1x128xi1>
      %116 = vector.shape_cast %115 : vector<1x128xi1> to vector<1x128xi1>
      %117 = vector.broadcast %116 : vector<1x128xi1> to vector<16x128xi1>
      %118 = arith.select %117, %102, %arg11 : vector<16x128xi1>, vector<16x128xf32>
      %119 = arith.extui %106 : vector<1x128xi1> to vector<1x128xi32>
      %120 = arith.select %115, %119, %arg10 : vector<1x128xi1>, vector<1x128xi32>
      %c1_i32_44 = arith.constant 1 : i32
      %121 = vector.broadcast %c1_i32_44 : i32 to vector<1x128xi32>
      %122 = arith.select %109, %121, %arg9 : vector<1x128xi1>, vector<1x128xi32>
      scf.yield %122, %120, %118 : vector<1x128xi32>, vector<1x128xi32>, vector<16x128xf32>
    }
    %c8_i32_20 = arith.constant 8 : i32
    %40 = tpu.iota {dimensions = array<i32: 0>} : vector<16x128xi32>
    %c10_i32 = arith.constant 10 : i32
    %41 = vector.broadcast %c10_i32 : i32 to vector<16x128xi32>
    %42 = arith.cmpi slt, %40, %41 : vector<16x128xi32>
    %cst_21 = arith.constant 0xFF800000 : f32
    %43 = vector.broadcast %cst_21 : f32 to vector<16x128xf32>
    %44 = arith.select %42, %39#2, %43 : vector<16x128xi1>, vector<16x128xf32>
    %cst_22 = arith.constant dense<0xFF800000> : vector<128xf32>
    %45 = vector.multi_reduction <maximumf>, %44, %cst_22 [0] : vector<16x128xf32> to vector<128xf32>
    %46 = vector.shape_cast %45 : vector<128xf32> to vector<1x128xf32>
    %47 = vector.broadcast %46 : vector<1x128xf32> to vector<16x128xf32>
    %48 = arith.cmpf oeq, %44, %47 : vector<16x128xf32>
    %c16_i32 = arith.constant 16 : i32
    %49 = vector.broadcast %c16_i32 : i32 to vector<16x128xi32>
    %50 = arith.select %48, %40, %49 : vector<16x128xi1>, vector<16x128xi32>
    %cst_23 = arith.constant dense<2147483647> : vector<128xi32>
    %51 = vector.multi_reduction <minsi>, %50, %cst_23 [0] : vector<16x128xi32> to vector<128xi32>
    %52 = vector.shape_cast %51 : vector<128xi32> to vector<1x128xi32>
    %c0_i32_24 = arith.constant 0 : i32
    %53 = vector.broadcast %c0_i32_24 : i32 to vector<1x128xi32>
    %54 = arith.cmpi ne, %39#1, %53 : vector<1x128xi32>
    %c-1_i32 = arith.constant -1 : i32
    %55 = vector.broadcast %c-1_i32 : i32 to vector<1x128xi32>
    %56 = arith.select %54, %55, %52 : vector<1x128xi1>, vector<1x128xi32>
    %c255_i32 = arith.constant 255 : i32
    %57 = vector.broadcast %c255_i32 : i32 to vector<1x128xi32>
    %c0_i32_25 = arith.constant 0 : i32
    %58 = vector.broadcast %c0_i32_25 : i32 to vector<1x128xi32>
    %59 = arith.cmpi eq, %56, %58 : vector<1x128xi32>
    %c0_i32_26 = arith.constant 0 : i32
    %60 = vector.broadcast %c0_i32_26 : i32 to vector<1x128xi32>
    %61 = arith.select %59, %60, %57 : vector<1x128xi1>, vector<1x128xi32>
    %c1_i32_27 = arith.constant 1 : i32
    %62 = vector.broadcast %c1_i32_27 : i32 to vector<1x128xi32>
    %63 = arith.cmpi eq, %56, %62 : vector<1x128xi32>
    %c1_i32_28 = arith.constant 1 : i32
    %64 = vector.broadcast %c1_i32_28 : i32 to vector<1x128xi32>
    %65 = arith.select %63, %64, %61 : vector<1x128xi1>, vector<1x128xi32>
    %c2_i32 = arith.constant 2 : i32
    %66 = vector.broadcast %c2_i32 : i32 to vector<1x128xi32>
    %67 = arith.cmpi eq, %56, %66 : vector<1x128xi32>
    %c2_i32_29 = arith.constant 2 : i32
    %68 = vector.broadcast %c2_i32_29 : i32 to vector<1x128xi32>
    %69 = arith.select %67, %68, %65 : vector<1x128xi1>, vector<1x128xi32>
    %c5_i32 = arith.constant 5 : i32
    %70 = vector.broadcast %c5_i32 : i32 to vector<1x128xi32>
    %71 = arith.cmpi eq, %56, %70 : vector<1x128xi32>
    %c3_i32 = arith.constant 3 : i32
    %72 = vector.broadcast %c3_i32 : i32 to vector<1x128xi32>
    %73 = arith.select %71, %72, %69 : vector<1x128xi1>, vector<1x128xi32>
    %c6_i32 = arith.constant 6 : i32
    %74 = vector.broadcast %c6_i32 : i32 to vector<1x128xi32>
    %75 = arith.cmpi eq, %56, %74 : vector<1x128xi32>
    %c4_i32 = arith.constant 4 : i32
    %76 = vector.broadcast %c4_i32 : i32 to vector<1x128xi32>
    %77 = arith.select %75, %76, %73 : vector<1x128xi1>, vector<1x128xi32>
    %c9_i32 = arith.constant 9 : i32
    %78 = vector.broadcast %c9_i32 : i32 to vector<1x128xi32>
    %79 = arith.cmpi eq, %56, %78 : vector<1x128xi32>
    %c5_i32_30 = arith.constant 5 : i32
    %80 = vector.broadcast %c5_i32_30 : i32 to vector<1x128xi32>
    %81 = arith.select %79, %80, %77 : vector<1x128xi1>, vector<1x128xi32>
    %c7_i32 = arith.constant 7 : i32
    %82 = vector.broadcast %c7_i32 : i32 to vector<1x128xi32>
    %83 = arith.cmpi eq, %56, %82 : vector<1x128xi32>
    %c6_i32_31 = arith.constant 6 : i32
    %84 = vector.broadcast %c6_i32_31 : i32 to vector<1x128xi32>
    %85 = arith.select %83, %84, %81 : vector<1x128xi1>, vector<1x128xi32>
    %c8_i32_32 = arith.constant 8 : i32
    %86 = vector.broadcast %c8_i32_32 : i32 to vector<1x128xi32>
    %87 = arith.cmpi eq, %56, %86 : vector<1x128xi32>
    %c7_i32_33 = arith.constant 7 : i32
    %88 = vector.broadcast %c7_i32_33 : i32 to vector<1x128xi32>
    %89 = arith.select %87, %88, %85 : vector<1x128xi1>, vector<1x128xi32>
    %c0_34 = arith.constant 0 : index
    %c0_35 = arith.constant 0 : index
    %90 = vector.load %arg7[%c0_34, %c0_35] : memref<1x128xi32, #tpu.memory_space<vmem>>, vector<1x128xi32>
    tpu.vector_store %arg7[%c0_34, %c0_35], %89 {strides = array<i32>} : memref<1x128xi32, #tpu.memory_space<vmem>>, vector<1x128xi32>,
    return
  }
  func.func @transform_0(%arg0: i32) -> (i32, i32) {
    %c0_i32 = arith.constant 0 : i32
    %c0_i32_0 = arith.constant 0 : i32
    %c0_i32_1 = arith.constant 0 : i32
    return %c0_i32, %c0_i32_0 : i32, i32
  }
  func.func @transform_1(%arg0: i32) -> (i32, i32) {
    %c0_i32 = arith.constant 0 : i32
    %c0_i32_0 = arith.constant 0 : i32
    %c0_i32_1 = arith.constant 0 : i32
    return %c0_i32, %c0_i32_0 : i32, i32
  }
  func.func @transform_2(%arg0: i32) -> (i32, i32) {
    %c0_i32 = arith.constant 0 : i32
    %c0_i32_0 = arith.constant 0 : i32
    %c0_i32_1 = arith.constant 0 : i32
    return %c0_i32, %c0_i32_0 : i32, i32
  }
  func.func @transform_3(%arg0: i32) -> (i32, i32) {
    %c0_i32 = arith.constant 0 : i32
    %c0_i32_0 = arith.constant 0 : i32
    %c0_i32_1 = arith.constant 0 : i32
    return %c0_i32, %c0_i32_0 : i32, i32
  }
  func.func @transform_4(%arg0: i32) -> (i32, i32) {
    %c0_i32 = arith.constant 0 : i32
    %c0_i32_0 = arith.constant 0 : i32
    %c0_i32_1 = arith.constant 0 : i32
    return %c0_i32, %c0_i32_0 : i32, i32
  }
  func.func @transform_5(%arg0: i32) -> (i32, i32) {
    %c0_i32 = arith.constant 0 : i32
    %c0_i32_0 = arith.constant 0 : i32
    %c0_i32_1 = arith.constant 0 : i32
    return %c0_i32, %c0_i32_0 : i32, i32
  }
  func.func @transform_6(%arg0: i32) -> (i32, i32) {
    %c0_i32 = arith.constant 0 : i32
    %c0_i32_0 = arith.constant 0 : i32
    return %c0_i32, %arg0 : i32, i32
  }
}

</mosaic_0001>

<llo_original>
// kernel: tpu_custom_call.1
$region0: #{tpu_custom_call.1}
  #allocation0 [shape = 'u32[]', space=smem, size = 0x4, offset = 0x4, fixed_abs, tag = 'smem constant byte address 0x4 - core index']
  #allocation1 [shape = 'u32[144,128]{1,0:T(1,128)}', space=vmem, size = 0x12000, scoped, tag = 'internal scratch']
  %s0 = inlined_call_operand.vmem [shape: f32[32,1], index: 0, kind: input, shape index: {}]
  %s1 = inlined_call_operand.vmem [shape: f32[32,1], index: 1, kind: input, shape index: {}]
  %s2 = inlined_call_operand.vmem [shape: f32[32,1], index: 2, kind: input, shape index: {}]
  %s3 = inlined_call_operand.vmem [shape: f32[32,1], index: 3, kind: input, shape index: {}]
  %s4 = inlined_call_operand.vmem [shape: f32[16,32], index: 4, kind: input, shape index: {}]
  %s5 = inlined_call_operand.vmem [shape: f32[16,1], index: 5, kind: input, shape index: {}]
  %s6 = inlined_call_operand.hbm [shape: s32[1,256], index: 6, kind: output, shape index: {}]
  %s7 = sld [smem:[#allocation0]]
  $region64: #{tpu_custom_call.1} parent=0
    _
  %s9 = ssub.s32 1, %s7
  %s10 = scalar_select 0, %s9, %s7
  $region1: #{tpu_custom_call.1} parent=0
    #allocation2 [shape = 'u8[1024]{0}', space=vmem, size = 0x400, scoped, tag = 'output window, operand 0']
    #allocation3 [shape = 's32[2]{0}', space=sflag, size = 0x8, scoped, tag = 'scoped memory for tpu_custom_call.1']
    %11 = vsyncpa [#allocation3], 0
    %s12 = scalar_lea.sflag [#allocation3], 1
    %13 = vsyncpa %s12, 0
    loop: start=0, step=1, limit=4
    $region2: #{tpu_custom_call.1} parent=1 // loop_pre_header
      _
    $region3: #{tpu_custom_call.1} parent=1 // loop_header
      %s15 = sphi 0, %s19
      %p16 = scmp.ge.s32.totalorder %s15, 4
      %s23 = sphi 0, %s23
      %s25 = sphi 0, %s23
      %s26 = sphi 0, %s25
      %s40 = sphi 0, %s26
      %s44 = sphi 0, %s44
      %s46 = sphi 0, %s44
      %s47 = sphi 0, %s46
      %s61 = sphi 0, %s47
      %s65 = sphi 0, %s65
      %s67 = sphi 0, %s65
      %s68 = sphi 0, %s67
      %s82 = sphi 0, %s68
      %s86 = sphi 0, %s86
      %s88 = sphi 0, %s86
      %s89 = sphi 0, %s88
      %s103 = sphi 0, %s89
      %s107 = sphi 0, %s107
      %s109 = sphi 0, %s107
      %s110 = sphi 0, %s109
      %s124 = sphi 0, %s110
      %s128 = sphi 0, %s128
      %s130 = sphi 0, %s128
      %s131 = sphi 0, %s130
      %s145 = sphi 0, %s131
      %s151 = sphi 0, %s153
      %s154 = sphi 0, %s151
      %s155 = sphi 0, %s154
      %s171 = sphi 0, %s155
    $region4: #{tpu_custom_call.1} parent=1 // loop_header_branch
      %18 = sbr.rel (%p16) target = $region8
    $region5: #{tpu_custom_call.1} parent=1 // loop_body
      %s20 = ssub.s32 %s15, 1
      %s21 = ssub.s32 %s15, 2
      %s22 = sadd.s32 %s15, 1
      %s24 = sadd.s32 %s23, 1
      %p27 = scmp.eq.s32.totalorder %s15, 1
      %p28 = scmp.ne.s32.totalorder %s23, %s25
      %p29 = scmp.eq.s32.totalorder %s15, 0
      %p30 = por %p28, %p29
      %p31 = scmp.ne.s32.totalorder %s23, %s25
      %p32 = scmp.eq.s32.totalorder %s20, 1
      %p33 = por %p31, %p32
      %p34 = scmp.ne.s32.totalorder %s25, %s26
      %p35 = scmp.eq.s32.totalorder %s20, 0
      %p36 = por %p34, %p35
      %p37 = scmp.ne.s32.totalorder %s25, %s26
      %p38 = scmp.eq.s32.totalorder %s21, 1
      %p39 = por %p37, %p38
      %p41 = scmp.ne.s32.totalorder %s26, %s40
      %p42 = scmp.eq.s32.totalorder %s21, 0
      %p43 = por %p41, %p42
      %s45 = sadd.s32 %s44, 1
      %p48 = scmp.eq.s32.totalorder %s15, 1
      %p49 = scmp.ne.s32.totalorder %s44, %s46
      %p50 = scmp.eq.s32.totalorder %s15, 0
      %p51 = por %p49, %p50
      %p52 = scmp.ne.s32.totalorder %s44, %s46
      %p53 = scmp.eq.s32.totalorder %s20, 1
      %p54 = por %p52, %p53
      %p55 = scmp.ne.s32.totalorder %s46, %s47
      %p56 = scmp.eq.s32.totalorder %s20, 0
      %p57 = por %p55, %p56
      %p58 = scmp.ne.s32.totalorder %s46, %s47
      %p59 = scmp.eq.s32.totalorder %s21, 1
      %p60 = por %p58, %p59
      %p62 = scmp.ne.s32.totalorder %s47, %s61
      %p63 = scmp.eq.s32.totalorder %s21, 0
      %p64 = por %p62, %p63
      %s66 = sadd.s32 %s65, 1
      %p69 = scmp.eq.s32.totalorder %s15, 1
      %p70 = scmp.ne.s32.totalorder %s65, %s67
      %p71 = scmp.eq.s32.totalorder %s15, 0
      %p72 = por %p70, %p71
      %p73 = scmp.ne.s32.totalorder %s65, %s67
      %p74 = scmp.eq.s32.totalorder %s20, 1
      %p75 = por %p73, %p74
      %p76 = scmp.ne.s32.totalorder %s67, %s68
      %p77 = scmp.eq.s32.totalorder %s20, 0
      %p78 = por %p76, %p77
      %p79 = scmp.ne.s32.totalorder %s67, %s68
      %p80 = scmp.eq.s32.totalorder %s21, 1
      %p81 = por %p79, %p80
      %p83 = scmp.ne.s32.totalorder %s68, %s82
      %p84 = scmp.eq.s32.totalorder %s21, 0
      %p85 = por %p83, %p84
      %s87 = sadd.s32 %s86, 1
      %p90 = scmp.eq.s32.totalorder %s15, 1
      %p91 = scmp.ne.s32.totalorder %s86, %s88
      %p92 = scmp.eq.s32.totalorder %s15, 0
      %p93 = por %p91, %p92
      %p94 = scmp.ne.s32.totalorder %s86, %s88
      %p95 = scmp.eq.s32.totalorder %s20, 1
      %p96 = por %p94, %p95
      %p97 = scmp.ne.s32.totalorder %s88, %s89
      %p98 = scmp.eq.s32.totalorder %s20, 0
      %p99 = por %p97, %p98
      %p100 = scmp.ne.s32.totalorder %s88, %s89
      %p101 = scmp.eq.s32.totalorder %s21, 1
      %p102 = por %p100, %p101
      %p104 = scmp.ne.s32.totalorder %s89, %s103
      %p105 = scmp.eq.s32.totalorder %s21, 0
      %p106 = por %p104, %p105
      %s108 = sadd.s32 %s107, 1
      %p111 = scmp.eq.s32.totalorder %s15, 1
      %p112 = scmp.ne.s32.totalorder %s107, %s109
      %p113 = scmp.eq.s32.totalorder %s15, 0
      %p114 = por %p112, %p113
      %p115 = scmp.ne.s32.totalorder %s107, %s109
      %p116 = scmp.eq.s32.totalorder %s20, 1
      %p117 = por %p115, %p116
      %p118 = scmp.ne.s32.totalorder %s109, %s110
      %p119 = scmp.eq.s32.totalorder %s20, 0
      %p120 = por %p118, %p119
      %p121 = scmp.ne.s32.totalorder %s109, %s110
      %p122 = scmp.eq.s32.totalorder %s21, 1
      %p123 = por %p121, %p122
      %p125 = scmp.ne.s32.totalorder %s110, %s124
      %p126 = scmp.eq.s32.totalorder %s21, 0
      %p127 = por %p125, %p126
      %s129 = sadd.s32 %s128, 1
      %p132 = scmp.eq.s32.totalorder %s15, 1
      %p133 = scmp.ne.s32.totalorder %s128, %s130
      %p134 = scmp.eq.s32.totalorder %s15, 0
      %p135 = por %p133, %p134
      %p136 = scmp.ne.s32.totalorder %s128, %s130
      %p137 = scmp.eq.s32.totalorder %s20, 1
      %p138 = por %p136, %p137
      %p139 = scmp.ne.s32.totalorder %s130, %s131
      %p140 = scmp.eq.s32.totalorder %s20, 0
      %p141 = por %p139, %p140
      %p142 = scmp.ne.s32.totalorder %s130, %s131
      %p143 = scmp.eq.s32.totalorder %s21, 1
      %p144 = por %p142, %p143
      %p146 = scmp.ne.s32.totalorder %s131, %s145
      %p147 = scmp.eq.s32.totalorder %s21, 0
      %p148 = por %p146, %p147
      %s149 = ssub.s32 %s15, %s22
      %p150 = scmp.eq.s32.totalorder %s149, 0
      %s152 = sadd.s32 %s151, 1
      %s153 = scalar_select %p150, %s151, %s152
      %p156 = pneg %p150
      %p157 = scmp.eq.s32.totalorder %s15, 1
      %p158 = por %p156, %p157
      %p159 = scmp.ne.s32.totalorder %s151, %s154
      %p160 = scmp.eq.s32.totalorder %s15, 0
      %p161 = por %p159, %p160
      %p162 = scmp.ne.s32.totalorder %s151, %s154
      %p163 = scmp.eq.s32.totalorder %s20, 1
      %p164 = por %p162, %p163
      %p165 = scmp.ne.s32.totalorder %s154, %s155
      %p166 = scmp.eq.s32.totalorder %s20, 0
      %p167 = por %p165, %p166
      %p168 = scmp.ne.s32.totalorder %s154, %s155
      %p169 = scmp.eq.s32.totalorder %s21, 1
      %p170 = por %p168, %p169
      %p172 = scmp.ne.s32.totalorder %s155, %s171
      %p173 = scmp.eq.s32.totalorder %s21, 0
      %p174 = por %p172, %p173
      %p175 = scmp.le.s32.totalorder 1, %s15
      %p176 = scmp.lt.s32.totalorder %s15, 3
      %p177 = pnand %p175, %p176
      %p178 = pneg %p177
      // Predicated region
      $region9: #{tpu_custom_call.1} parent=5 // pred_check
        _
      $region10: #{tpu_custom_call.1} parent=5 // pred_check_branch
        %180 = sbr.rel (%p177) target = $region12
      $region11: #{tpu_custom_call.1} parent=5 // pred_region
        %s181 = ssub.s32 %s15, 1
        // Predicated region
        $region13: #{tpu_custom_call.1} parent=11 // pred_check
          %p182 = pneg %p36
        $region14: #{tpu_custom_call.1} parent=11 // pred_check_branch
          %184 = sbr.rel (%p182) target = $region16
        $region15: #{tpu_custom_call.1} parent=11 // pred_region
          _
        $region16: #{tpu_custom_call.1} parent=11 // pred_fallthru
          _
        // Predicated region
        $region17: #{tpu_custom_call.1} parent=11 // pred_check
          %p185 = pneg %p57
        $region18: #{tpu_custom_call.1} parent=11 // pred_check_branch
          %187 = sbr.rel (%p185) target = $region20
        $region19: #{tpu_custom_call.1} parent=11 // pred_region
          _
        $region20: #{tpu_custom_call.1} parent=11 // pred_fallthru
          _
        // Predicated region
        $region21: #{tpu_custom_call.1} parent=11 // pred_check
          %p188 = pneg %p78
        $region22: #{tpu_custom_call.1} parent=11 // pred_check_branch
          %190 = sbr.rel (%p188) target = $region24
        $region23: #{tpu_custom_call.1} parent=11 // pred_region
          _
        $region24: #{tpu_custom_call.1} parent=11 // pred_fallthru
          _
        // Predicated region
        $region25: #{tpu_custom_call.1} parent=11 // pred_check
          %p191 = pneg %p99
        $region26: #{tpu_custom_call.1} parent=11 // pred_check_branch
          %193 = sbr.rel (%p191) target = $region28
        $region27: #{tpu_custom_call.1} parent=11 // pred_region
          _
        $region28: #{tpu_custom_call.1} parent=11 // pred_fallthru
          _
        // Predicated region
        $region29: #{tpu_custom_call.1} parent=11 // pred_check
          %p194 = pneg %p120
        $region30: #{tpu_custom_call.1} parent=11 // pred_check_branch
          %196 = sbr.rel (%p194) target = $region32
        $region31: #{tpu_custom_call.1} parent=11 // pred_region
          _
        $region32: #{tpu_custom_call.1} parent=11 // pred_fallthru
          _
        // Predicated region
        $region33: #{tpu_custom_call.1} parent=11 // pred_check
          %p197 = pneg %p141
        $region34: #{tpu_custom_call.1} parent=11 // pred_check_branch
          %199 = sbr.rel (%p197) target = $region36
        $region35: #{tpu_custom_call.1} parent=11 // pred_region
          _
        $region36: #{tpu_custom_call.1} parent=11 // pred_fallthru
          _
      $region12: #{tpu_custom_call.1} parent=5 // pred_fallthru
        _
      %p200 = scmp.lt.s32.totalorder %s15, 2
      // Predicated region
      $region37: #{tpu_custom_call.1} parent=5 // pred_check
        %p201 = pneg %p200
      $region38: #{tpu_custom_call.1} parent=5 // pred_check_branch
        %203 = sbr.rel (%p201) target = $region40
      $region39: #{tpu_custom_call.1} parent=5 // pred_region
        _
      $region40: #{tpu_custom_call.1} parent=5 // pred_fallthru
        _
      %p204 = scmp.le.s32.totalorder 1, %s15
      %p205 = scmp.lt.s32.totalorder %s15, 3
      %p206 = pnand %p204, %p205
      %p207 = pneg %p206
      // Predicated region
      $region41: #{tpu_custom_call.1} parent=5 // pred_check
        _
      $region42: #{tpu_custom_call.1} parent=5 // pred_check_branch
        %209 = sbr.rel (%p206) target = $region44
      $region43: #{tpu_custom_call.1} parent=5 // pred_region
        %s210 = ssub.s32 %s15, 1
        %p211 = pneg %p36
        %p212 = pneg %p33
        %p213 = pneg %p57
        %p214 = pneg %p54
        %p215 = pneg %p78
        %p216 = pneg %p75
        %p217 = pneg %p99
        %p218 = pneg %p96
        %p219 = pneg %p120
        %p220 = pneg %p117
        %p221 = pneg %p141
        %p222 = pneg %p138
        %p223 = pneg %p167
        %p224 = pneg %p164
        %s225 = sand.u32 %s154, 1
        %s226 = scalar_lea.sflag [#allocation3], %s225
        %s227 = sand.u32 %s154, 1
        %s228 = scalar_lea.vmem [#allocation2], %s227
        %v229 = vlaneseq
        %v230 = vand.u32 %v229, 127
        %v231 = vcvt.s32.f32 %v230
        %v232 = vrcp.pop 16.0
        %v233 = vmul.f32 %v231, %v232
        %v234 = vfloor.f32 %v233
        %v235 = vmul.f32 %v234, 16.0
        %v236 = vsub.f32 %v231, %v235
        %v237 = vmul.f32 %v236, 3.8093333
        %v238 = vadd.f32 %v237, -28.57
        %s239 = smul.u32 %s20, 8
        %s240 = scvt.s32.f32 %s239
        %v241 = vstv %s240
        %v242 = vadd.f32 %v241, %v234
        %v243 = vmul.f32 %v242, -3.492
        %v244 = vadd.f32 %v243, 52.38
        %v245 = vld [vmem:[%s0] sm:$0xff]
        %v246 = vld [vmem:[%s0 + $0x8] sm:$0xff]
        %v247 = vld [vmem:[%s0 + $0x10] sm:$0xff]
        %v248 = vld [vmem:[%s0 + $0x18] sm:$0xff]
        %v249 = vld [vmem:[%s1] sm:$0xff]
        %v250 = vld [vmem:[%s1 + $0x8] sm:$0xff]
        %v251 = vld [vmem:[%s1 + $0x10] sm:$0xff]
        %v252 = vld [vmem:[%s1 + $0x18] sm:$0xff]
        %v253 = vld [vmem:[%s2] sm:$0xff]
        %v254 = vld [vmem:[%s2 + $0x8] sm:$0xff]
        %v255 = vld [vmem:[%s2 + $0x10] sm:$0xff]
        %v256 = vld [vmem:[%s2 + $0x18] sm:$0xff]
        %v257 = vld [vmem:[%s3] sm:$0xff]
        %v258 = vld [vmem:[%s3 + $0x8] sm:$0xff]
        %v259 = vld [vmem:[%s3 + $0x10] sm:$0xff]
        %v260 = vld [vmem:[%s3 + $0x18] sm:$0xff]
        %v261 = vld [vmem:[%s4] sm:$0xff]
        %v262 = vld [vmem:[%s4 + $0x8] sm:$0xff]
        %v263 = vld [vmem:[%s5] sm:$0xff]
        %v264 = vld [vmem:[%s5 + $0x8] sm:$0xff]
        %266 = vset.pattern.permute.xlu0 0
        %267 = vperm.xlu0 %266, %v245
        %v268 = vpop.permute.xlu0 %267
        %271 = vset.pattern.permute.xlu0 0
        %272 = vperm.xlu0 %271, %v246
        %v273 = vpop.permute.xlu0 %272
        %276 = vset.pattern.permute.xlu0 0
        %277 = vperm.xlu0 %276, %v247
        %v278 = vpop.permute.xlu0 %277
        %281 = vset.pattern.permute.xlu0 0
        %282 = vperm.xlu0 %281, %v248
        %v283 = vpop.permute.xlu0 %282
        %v285 = vmul.f32 %v268, %v238
        %v286 = vmul.f32 %v273, %v238
        %v287 = vmul.f32 %v278, %v238
        %v288 = vmul.f32 %v283, %v238
        %290 = vset.pattern.permute.xlu0 0
        %291 = vperm.xlu0 %290, %v253
        %v292 = vpop.permute.xlu0 %291
        %295 = vset.pattern.permute.xlu0 0
        %296 = vperm.xlu0 %295, %v254
        %v297 = vpop.permute.xlu0 %296
        %300 = vset.pattern.permute.xlu0 0
        %301 = vperm.xlu0 %300, %v255
        %v302 = vpop.permute.xlu0 %301
        %305 = vset.pattern.permute.xlu0 0
        %306 = vperm.xlu0 %305, %v256
        %v307 = vpop.permute.xlu0 %306
        %v309 = vmul.f32 %v292, %v244
        %v310 = vmul.f32 %v297, %v244
        %v311 = vmul.f32 %v302, %v244
        %v312 = vmul.f32 %v307, %v244
        %v313 = vadd.f32 %v285, %v309
        %v314 = vadd.f32 %v286, %v310
        %v315 = vadd.f32 %v287, %v311
        %v316 = vadd.f32 %v288, %v312
        %318 = vset.pattern.permute.xlu0 0
        %319 = vperm.xlu0 %318, %v257
        %v320 = vpop.permute.xlu0 %319
        %323 = vset.pattern.permute.xlu0 0
        %324 = vperm.xlu0 %323, %v258
        %v325 = vpop.permute.xlu0 %324
        %328 = vset.pattern.permute.xlu0 0
        %329 = vperm.xlu0 %328, %v259
        %v330 = vpop.permute.xlu0 %329
        %333 = vset.pattern.permute.xlu0 0
        %334 = vperm.xlu0 %333, %v260
        %v335 = vpop.permute.xlu0 %334
        %v337 = vadd.f32 %v313, %v320
        %v338 = vadd.f32 %v314, %v325
        %v339 = vadd.f32 %v315, %v330
        %v340 = vadd.f32 %v316, %v335
        loop: start=0, step=1, limit=8
        $region45: #{tpu_custom_call.1} parent=43 // loop_pre_header
          _
        $region46: #{tpu_custom_call.1} parent=43 // loop_header
          %s342 = sphi 0, %s346
          %p343 = scmp.ge.s32.totalorder %s342, 8
          %v347 = vphi 0, %v502
          %v348 = vphi 0, %v501
          %v349 = vphi 0.0, %v498
          %v350 = vphi 0.0, %v499
        $region47: #{tpu_custom_call.1} parent=43 // loop_header_branch
          %345 = sbr.rel (%p343) target = $region51
        $region48: #{tpu_custom_call.1} parent=43 // loop_body
          %s351 = scvt.s32.f32 %s342
          %s352 = smul.f32 %s351, -0.2857143
          %s353 = sadd.f32 %s352, 0.5
          %v354 = vstv %s353
          %v355 = vmul.f32 %v249, %v354
          %v356 = vmul.f32 %v250, %v354
          %v357 = vmul.f32 %v251, %v354
          %v358 = vmul.f32 %v252, %v354
          %360 = vset.pattern.permute.xlu0 0
          %361 = vperm.xlu0 %360, %v355
          %v362 = vpop.permute.xlu0 %361
          %365 = vset.pattern.permute.xlu0 0
          %366 = vperm.xlu0 %365, %v356
          %v367 = vpop.permute.xlu0 %366
          %370 = vset.pattern.permute.xlu0 0
          %371 = vperm.xlu0 %370, %v357
          %v372 = vpop.permute.xlu0 %371
          %375 = vset.pattern.permute.xlu0 0
          %376 = vperm.xlu0 %375, %v358
          %v377 = vpop.permute.xlu0 %376
          %v379 = vadd.f32 %v337, %v362
          %v380 = vadd.f32 %v338, %v367
          %v381 = vadd.f32 %v339, %v372
          %v382 = vadd.f32 %v340, %v377
          %v383 = vmax.f32 %v379, 0.0
          %v384 = vmax.f32 %v380, 0.0
          %v385 = vmax.f32 %v381, 0.0
          %v386 = vmax.f32 %v382, 0.0
          %388 = vset.pattern.permute.xlu0 0
          %389 = vperm.xlu0 %388, %v263
          %v390 = vpop.permute.xlu0 %389
          %393 = vset.pattern.permute.xlu0 0
          %394 = vperm.xlu0 %393, %v264
          %v395 = vpop.permute.xlu0 %394
          %vm397 = vcmask 261120
          %v399 = vsel %vm397, %v261, 0
          %v402 = vsel %vm397, %v262, 0
          %404 = vmatprep.subr.mxu0 0.0
          %405 = vmatpush1.msra.mxu0 %v383
          %406 = vmatprep.subr.mxu0 0.0
          %407 = vmatpush1.msra.mxu0 %v384
          %408 = vmatprep.subr.mxu0 0.0
          %409 = vmatpush1.msra.mxu0 %v385
          %410 = vmatprep.subr.mxu0 0.0
          %411 = vmatpush1.msra.mxu0 %v386
          %412 = vmatprep.subr.mxu0 0.0
          %413 = vmatpush1.msra.mxu0 0.0
          %414 = vmatprep.subr.mxu0 0.0
          %415 = vmatpush1.msra.mxu0 0.0
          %416 = vmatprep.subr.mxu0 0.0
          %417 = vmatpush1.msra.mxu0 0.0
          %418 = vmatprep.subr.mxu0 0.0
          %419 = vmatpush1.msra.mxu0 0.0
          %420 = vmatprep.subr.mxu0 0.0
          %421 = vmatpush1.msra.mxu0 0.0
          %422 = vmatprep.subr.mxu0 0.0
          %423 = vmatpush1.msra.mxu0 0.0
          %424 = vmatprep.subr.mxu0 0.0
          %425 = vmatpush1.msra.mxu0 0.0
          %426 = vmatprep.subr.mxu0 0.0
          %427 = vmatpush1.msra.mxu0 0.0
          %428 = vmatprep.subr.mxu0 0.0
          %429 = vmatpush1.msra.mxu0 0.0
          %430 = vmatprep.subr.mxu0 0.0
          %431 = vmatpush1.msra.mxu0 0.0
          %432 = vmatprep.subr.mxu0 0.0
          %433 = vmatpush1.msra.mxu0 0.0
          %434 = vmatprep.subr.mxu0 0.0
          %435 = vmatpush1.msra.mxu0 0.0
          %436 = vmatprep.subr.mxu0 0.0
          %437 = vmatpush1.msra.mxu0 0.0
          %438 = vmatprep.subr.mxu0 0.0
          %439 = vmatpush1.msra.mxu0 0.0
          %440 = vmatprep.subr.mxu0 0.0
          %441 = vmatpush1.msra.mxu0 0.0
          %442 = vmatprep.subr.mxu0 0.0
          %443 = vmatpush1.msra.mxu0 0.0
          %444 = vmatprep.subr.mxu0 0.0
          %445 = vmatpush1.msra.mxu0 0.0
          %446 = vmatprep.subr.mxu0 0.0
          %447 = vmatpush1.msra.mxu0 0.0
          %448 = vmatprep.subr.mxu0 0.0
          %449 = vmatpush1.msra.mxu0 0.0
          %450 = vmatprep.subr.mxu0 0.0
          %451 = vmatpush1.msra.mxu0 0.0
          %452 = vmatprep.subr.mxu0 0.0
          %453 = vmatpush1.msra.mxu0 0.0
          %454 = vmatprep.subr.mxu0 0.0
          %455 = vmatpush1.msra.mxu0 0.0
          %456 = vmatprep.subr.mxu0 0.0
          %457 = vmatpush1.msra.mxu0 0.0
          %458 = vmatprep.subr.mxu0 0.0
          %459 = vmatpush1.msra.mxu0 0.0
          %460 = vmatprep.subr.mxu0 0.0
          %461 = vmatpush1.msra.mxu0 0.0
          %462 = vmatprep.subr.mxu0 0.0
          %463 = vmatpush1.msra.mxu0 0.0
          %464 = vmatprep.subr.mxu0 0.0
          %465 = vmatpush1.msra.mxu0 0.0
          %466 = vmatprep.subr.mxu0 0.0
          %467 = vmatpush1.msra.mxu0 0.0
          %468 = vmatprep.mubr.f32.mxu0 0.0
          %469 = vmatmul.mubr.f32.gmra.mrb[0].mxu0 %v399
          %v470 = vpop.f32.mrb[0].mxu0
          %v471 = vadd.f32 %v390, %v470
          %v472 = vpop.f32.mrb[0].mxu0
          %473 = vmatprep.mubr.f32.mxu0 0.0
          %474 = vmatmul.mubr.f32.gmra.mrb[0].mxu0 %v402
          %v475 = vpop.f32.mrb[0].mxu0
          %v476 = vadd.f32 %v395, %v475
          %v477 = vpop.f32.mrb[0].mxu0
          %478 = vdwg.mxu0
          %vm479 = vcmp.gt.f32.partialorder %v476, 3.0
          %vm480 = vcmp.gt.f32.partialorder %v476, 0.0
          %v481 = vsel %vm480, 1, 0
          %v482 = vrot.slane %v481, 7
          %vm483 = vcmp.ne.s32.totalorder %v482, 0
          %vm484 = vmor %vm479, %vm483
          %vm485 = vcmp.eq.s32.totalorder %v347, 0
          %vm486 = vmand %vm484, %vm485
          %p487 = scmp.eq.s32.totalorder %s342, 0
          %s488 = scalar_select %p487, 1, 0
          %v489 = vstv %s488
          %vm490 = vcmp.eq.s32.totalorder %v489, 1
          %vm491 = vmor %vm486, %vm490
          %v492 = vsel %vm491, 1, 0
          %v493 = vlaneseq
          %v494 = vshrl.u32 %v493, 7
          %v495 = vsub.s32 3, %v494
          %v496 = vrot.slane %v492, %v495
          %vm497 = vcmp.eq.s32.totalorder %v496, 1
          %v498 = vsel %vm497, %v471, %v349
          %v499 = vsel %vm497, %v476, %v350
          %v500 = vsel %vm479, 1, 0
          %v501 = vsel %vm491, %v500, %v348
          %v502 = vsel %vm484, 1, %v347
        $region49: #{tpu_custom_call.1} parent=43 // loop_footer
          %s346 = sadd.s32 1, %s342
        $region50: #{tpu_custom_call.1} parent=43 // loop_footer_branch
          %341 = sbr.rel target = $region46
        $region51: #{tpu_custom_call.1} parent=43 // loop_exit
          _
        %v503 = vlaneseq
        %v504 = vshrl.u32 %v503, 7
        %v505 = vadd.s32 %v504, 8
        %vm506 = vcmp.lt.s32.totalorder %v504, 10
        %vm507 = vcmp.lt.s32.totalorder %v505, 10
        %v508 = vsel %vm506, %v349, -inf
        %v509 = vsel %vm507, %v350, -inf
        %v510 = vmax.f32 %v508, %v509
        %v511 = vrot.slane %v510, 4
        %v512 = vmax.f32 %v510, %v511
        %v513 = vrot.slane %v512, 2
        %v514 = vmax.f32 %v512, %v513
        %v515 = vrot.slane %v514, 1
        %v516 = vmax.f32 %v514, %v515
        %vm517 = vcmp.eq.f32.partialorder %v508, %v516
        %vm518 = vcmp.eq.f32.partialorder %v509, %v516
        %v519 = vsel %vm517, %v504, 16
        %v520 = vsel %vm518, %v505, 16
        %vm521 = vcmp.lt.s32.totalorder %v519, %v520
        %v522 = vsel %vm521, %v519, %v520
        %v523 = vrot.slane %v522, 4
        %vm524 = vcmp.lt.s32.totalorder %v522, %v523
        %v525 = vsel %vm524, %v522, %v523
        %v526 = vrot.slane %v525, 2
        %vm527 = vcmp.lt.s32.totalorder %v525, %v526
        %v528 = vsel %vm527, %v525, %v526
        %v529 = vrot.slane %v528, 1
        %vm530 = vcmp.lt.s32.totalorder %v528, %v529
        %v531 = vsel %vm530, %v528, %v529
        %vm532 = vcmp.ne.s32.totalorder %v348, 0
        %v533 = vsel %vm532, 4294967295, %v531
        %vm534 = vcmp.eq.s32.totalorder %v533, 0
        %v535 = vsel %vm534, 0, 255
        %vm536 = vcmp.eq.s32.totalorder %v533, 1
        %v537 = vsel %vm536, 1, %v535
        %vm538 = vcmp.eq.s32.totalorder %v533, 2
        %v539 = vsel %vm538, 2, %v537
        %vm540 = vcmp.eq.s32.totalorder %v533, 5
        %v541 = vsel %vm540, 3, %v539
        %vm542 = vcmp.eq.s32.totalorder %v533, 6
        %v543 = vsel %vm542, 4, %v541
        %vm544 = vcmp.eq.s32.totalorder %v533, 9
        %v545 = vsel %vm544, 5, %v543
        %vm546 = vcmp.eq.s32.totalorder %v533, 7
        %v547 = vsel %vm546, 6, %v545
        %vm548 = vcmp.eq.s32.totalorder %v533, 8
        %v549 = vsel %vm548, 7, %v547
        %550 = vst [vmem:[%s228 - $0x3] sm:$0x8] %v549
        %s551 = sand.u32 %s154, 1
        %s552 = scalar_lea.sflag [#allocation3], %s551
        %s553 = sand.u32 %s154, 1
        %s554 = scalar_lea.vmem [#allocation2], %s553
        // Predicated region
        $region52: #{tpu_custom_call.1} parent=43 // pred_check
          %p555 = pneg %p164
        $region53: #{tpu_custom_call.1} parent=43 // pred_check_branch
          %557 = sbr.rel (%p555) target = $region55
        $region54: #{tpu_custom_call.1} parent=43 // pred_region
          %s559 = ssub.s32 16, 16
          %560 = vsyncadd %s552, %s559
          %s561 = smul.addr %s20, 16
          %s562 = scalar_lea.hbm %s6, %s561
          %s564 = sshll.u32 %s554, 4
          %s565 = int_to_ptr.vmem [resolvable:$true] %s564
          %567 = dma.vmem_to_hbm [thread:$0]  %s565, 16, %s562, %s552
        $region55: #{tpu_custom_call.1} parent=43 // pred_fallthru
          _
      $region44: #{tpu_custom_call.1} parent=5 // pred_fallthru
        _
      %p568 = scmp.le.s32.totalorder 2, %s15
      // Predicated region
      $region56: #{tpu_custom_call.1} parent=5 // pred_check
        %p569 = pneg %p568
      $region57: #{tpu_custom_call.1} parent=5 // pred_check_branch
        %571 = sbr.rel (%p569) target = $region59
      $region58: #{tpu_custom_call.1} parent=5 // pred_region
        %s572 = ssub.s32 %s15, 2
        // Predicated region
        $region60: #{tpu_custom_call.1} parent=58 // pred_check
          %p573 = pneg %p170
        $region61: #{tpu_custom_call.1} parent=58 // pred_check_branch
          %575 = sbr.rel (%p573) target = $region63
        $region62: #{tpu_custom_call.1} parent=58 // pred_region
          %s576 = sand.u32 %s155, 1
          %s577 = scalar_lea.sflag [#allocation3], %s576
          %s578 = sand.u32 %s155, 1
          %s579 = scalar_lea.vmem [#allocation2], %s578
          %580 = dma.done %s577, 16
        $region63: #{tpu_custom_call.1} parent=58 // pred_fallthru
          _
      $region59: #{tpu_custom_call.1} parent=5 // pred_fallthru
        _
    $region6: #{tpu_custom_call.1} parent=1 // loop_footer
      %s19 = sadd.s32 1, %s15
    $region7: #{tpu_custom_call.1} parent=1 // loop_footer_branch
      %14 = sbr.rel target = $region3
    $region8: #{tpu_custom_call.1} parent=1 // loop_exit
      _
    %581 = vsyncpa [#allocation3], 1
    %s582 = scalar_lea.sflag [#allocation3], 1
    %583 = vsyncpa %s582, 1

</llo_original>
